<compile_context>
chip_gen: v5e
topology: v5e:2x2
jax: 0.10.0
libtpu: 0.0.40
codegen_flags: <defaults>
</compile_context>

<pallas_src>
import jax
import jax.numpy as jnp
from jax.experimental import pallas as pl
from jax.experimental.pallas import tpu as pltpu

_SUBLANE = 8
_LANE = 128


def _linear_svm_kernel(p_ref, x_ref, o_ref):
    # p_ref: (3,)        SMEM -> [w0, w1, b] scalars
    # x_ref: (2, TR, TC) VMEM -> feature planes; batch dense on sublanes+lanes
    # o_ref: (TR, TC)    VMEM
    w0 = p_ref[0]
    w1 = p_ref[1]
    b = p_ref[2]
    # Full-plane loads (no sublane sub-slicing); pure VPU broadcast FMA.
    x0 = x_ref[0].astype(jnp.float32)
    x1 = x_ref[1].astype(jnp.float32)
    o_ref[...] = x0 * w0 + x1 * w1 + b


def _pack_params(weight, bias):
    weight = jnp.asarray(weight, jnp.float32)
    bias = jnp.asarray(bias, jnp.float32)
    assert weight.shape == (1, 2), f"expected (1, 2) weight, got {weight.shape}"
    assert bias.shape == (1,), f"expected (1,) bias, got {bias.shape}"
    return jnp.concatenate([weight.reshape(-1), bias.reshape(-1)])  # (3,) = [w0,w1,b]


def _pick_tile(full, tile, align):
    t = min(tile, full)
    return max(align, (t // align) * align)


def linear_svm_forward_planar(x_planar, weight, bias, *, tile_r=256, tile_c=1024):
    """Pallas path.

    x_planar: (2, R, C) feature-planar batch (R % 8 == 0, C % 128 == 0).
    Returns (R, C) float32 with out[r, c] = fc([x0[r,c], x1[r,c]]).
    """
    assert x_planar.ndim == 3 and x_planar.shape[0] == 2, x_planar.shape
    _, r, c = x_planar.shape
    assert r % _SUBLANE == 0 and c % _LANE == 0, (r, c)

    tr = _pick_tile(r, tile_r, _SUBLANE)
    tc = _pick_tile(c, tile_c, _LANE)
    grid = (pl.cdiv(r, tr), pl.cdiv(c, tc))

    params = _pack_params(weight, bias)

    return pl.pallas_call(
        _linear_svm_kernel,
        out_shape=jax.ShapeDtypeStruct((r, c), jnp.float32),
        grid=grid,
        in_specs=[
            pl.BlockSpec(memory_space=pltpu.MemorySpace.SMEM),       # params (3,)
            pl.BlockSpec((2, tr, tc), lambda i, j: (0, i, j)),       # x planes
        ],
        out_specs=pl.BlockSpec((tr, tc), lambda i, j: (i, j)),       # dense output
        compiler_params=pltpu.CompilerParams(
            dimension_semantics=("parallel", "parallel")),
    )(params, x_planar)


def linear_svm_forward(x, weight, bias):
    """PyTorch-facing forward: x (N, 2) -> (N, 1), float32 math.

    For the (N, 2) row-major layout the fused XLA FMA is the fastest path:
    converting to the kernel's planar layout needs a full HBM transpose pass
    that costs more than the op itself (per perf review).  Callers that can
    keep activations feature-planar upstream should use
    linear_svm_forward_planar instead.
    """
    n, f = x.shape
    assert f == 2, "LinearSVM expects 2 input features"
    weight = jnp.asarray(weight, jnp.float32)
    bias = jnp.asarray(bias, jnp.float32)
    return x.astype(jnp.float32) @ weight.T + bias


def init_linear_params(key, in_features=2, out_features=1):
    """Deterministic init mimicking nn.Linear's U(-1/sqrt(fan_in), 1/sqrt(fan_in))."""
    kw, kb = jax.random.split(key)
    bound = 1.0 / jnp.sqrt(jnp.float32(in_features))
    weight = jax.random.uniform(
        kw, (out_features, in_features), jnp.float32, minval=-bound, maxval=bound)
    bias = jax.random.uniform(
        kb, (out_features,), jnp.float32, minval=-bound, maxval=bound)
    return weight, bias


if __name__ == "__main__":
    key = jax.random.PRNGKey(0)
    k_x, k_p = jax.random.split(key)

    weight, bias = init_linear_params(k_p)

    # Small feature-planar batch: 2 planes, batch = 8 x 256 = 2048 samples,
    # dense on sublanes (8) and lanes (2 x 128).
    r, c = 8, 256
    x_planar = jax.random.normal(k_x, (2, r, c), dtype=jnp.float32)

    out_planar = jax.block_until_ready(
        linear_svm_forward_planar(x_planar, weight, bias))

    # Reference 1: same math in plain JAX on the planar layout.
    w0, w1 = weight[0, 0], weight[0, 1]
    ref_planar = x_planar[0] * w0 + x_planar[1] * w1 + bias[0]
    assert out_planar.shape == (r, c)
    assert jnp.allclose(out_planar, ref_planar, atol=1e-5, rtol=1e-5)

    # Reference 2: cross-check against the PyTorch-facing (N, 2) formulation.
    x_rows = jnp.stack(
        [x_planar[0].reshape(-1), x_planar[1].reshape(-1)], axis=-1)  # (N, 2)
    ref_rows = linear_svm_forward(x_rows, weight, bias)               # (N, 1)
    assert jnp.allclose(out_planar.reshape(-1, 1), ref_rows, atol=1e-5, rtol=1e-5)

    print("KERNEL_OK")
</pallas_src>

<mosaic_0001>
module attributes {stable_mosaic.version = 11 : i64} {
  func.func @_linear_svm_kernel(%arg0: i32, %arg1: i32, %arg2: memref<3xf32, #tpu.memory_space<smem>>, %arg3: memref<2x8x256xf32, #tpu.memory_space<vmem>>, %arg4: memref<8x256xf32, #tpu.memory_space<vmem>>) attributes {dimension_semantics = [#tpu.dimension_semantics<parallel>, #tpu.dimension_semantics<parallel>], iteration_bounds = array<i64: 1, 1>, scalar_prefetch = 0 : i64, scratch_operands = 0 : i64, tpu.core_type = #tpu.core_type<tc>, window_params = [{transform_indices = @transform_0, window_bounds = array<i64: 3>}, {transform_indices = @transform_1, window_bounds = array<i64: 2, 8, 256>}, {transform_indices = @transform_2, window_bounds = array<i64: 8, 256>}]} {
    %c0 = arith.constant 0 : index
    %0 = memref.load %arg2[%c0] : memref<3xf32, #tpu.memory_space<smem>>
    %c1 = arith.constant 1 : index
    %1 = memref.load %arg2[%c1] : memref<3xf32, #tpu.memory_space<smem>>
    %c2 = arith.constant 2 : index
    %2 = memref.load %arg2[%c2] : memref<3xf32, #tpu.memory_space<smem>>
    %c0_0 = arith.constant 0 : index
    %c0_1 = arith.constant 0 : index
    %c0_2 = arith.constant 0 : index
    %3 = vector.load %arg3[%c0_0, %c0_1, %c0_2] : memref<2x8x256xf32, #tpu.memory_space<vmem>>, vector<1x8x256xf32>
    %4 = vector.shape_cast %3 : vector<1x8x256xf32> to vector<8x256xf32>
    %c1_3 = arith.constant 1 : index
    %c0_4 = arith.constant 0 : index
    %c0_5 = arith.constant 0 : index
    %5 = vector.load %arg3[%c1_3, %c0_4, %c0_5] : memref<2x8x256xf32, #tpu.memory_space<vmem>>, vector<1x8x256xf32>
    %6 = vector.shape_cast %5 : vector<1x8x256xf32> to vector<8x256xf32>
    %7 = vector.broadcast %0 : f32 to vector<8x256xf32>
    %8 = arith.mulf %4, %7 : vector<8x256xf32>
    %9 = vector.broadcast %1 : f32 to vector<8x256xf32>
    %10 = arith.mulf %6, %9 : vector<8x256xf32>
    %11 = arith.addf %8, %10 : vector<8x256xf32>
    %12 = vector.broadcast %2 : f32 to vector<8x256xf32>
    %13 = arith.addf %11, %12 : vector<8x256xf32>
    %c0_6 = arith.constant 0 : index
    %c0_7 = arith.constant 0 : index
    %14 = vector.load %arg4[%c0_6, %c0_7] : memref<8x256xf32, #tpu.memory_space<vmem>>, vector<8x256xf32>
    tpu.vector_store %arg4[%c0_6, %c0_7], %13 {strides = array<i32>} : memref<8x256xf32, #tpu.memory_space<vmem>>, vector<8x256xf32>,
    return
  }
  func.func @transform_0(%arg0: i32, %arg1: i32) -> i32 {
    %c0_i32 = arith.constant 0 : i32
    %c0_i32_0 = arith.constant 0 : i32
    return %c0_i32 : i32
  }
  func.func @transform_1(%arg0: i32, %arg1: i32) -> (i32, i32, i32) {
    %c0_i32 = arith.constant 0 : i32
    %c0_i32_0 = arith.constant 0 : i32
    return %c0_i32, %arg0, %arg1 : i32, i32, i32
  }
  func.func @transform_2(%arg0: i32, %arg1: i32) -> (i32, i32) {
    %c0_i32 = arith.constant 0 : i32
    return %arg0, %arg1 : i32, i32
  }
}

</mosaic_0001>

<llo_original>
// kernel: tpu_custom_call.1
$region0: #{tpu_custom_call.1}
  #allocation0 [shape = 'u32[]', space=smem, size = 0x4, offset = 0x4, fixed_abs, tag = 'smem constant byte address 0x4 - core index']
  #allocation1 [shape = 'u32[72,128]{1,0:T(1,128)}', space=vmem, size = 0x9000, scoped, tag = 'internal scratch']
  %s0 = inlined_call_operand.hbm [shape: f32[3], index: 0, kind: input, shape index: {}]
  %s1 = inlined_call_operand.hbm [shape: f32[2,8,256], index: 1, kind: input, shape index: {}]
  %s2 = inlined_call_operand.hbm [shape: f32[8,256], index: 2, kind: output, shape index: {}]
  %s3 = sld [smem:[#allocation0]]
  $region26: #{tpu_custom_call.1} parent=0
    _
  %s5 = ssub.s32 1, %s3
  %s6 = scalar_select 0, %s5, %s3
  $region1: #{tpu_custom_call.1} parent=0
    #allocation2 [shape = 'u8[512]{0}', space=smem, size = 0x200, scoped, tag = 'input window, operand 0, single buffered']
    #allocation3 [shape = 's32[1]{0}', space=sflag, size = 0x4, scoped, tag = 'scoped memory for tpu_custom_call.1']
    #allocation4 [shape = 's32[1]{0}', space=sflag, size = 0x4, scoped, tag = 'scoped memory for tpu_custom_call.1']
    #allocation5 [shape = 's32[1]{0}', space=sflag, size = 0x4, scoped, tag = 'scoped memory for tpu_custom_call.1']
    #allocation6 [shape = 'u8[16384]{0}', space=vmem, size = 0x4000, scoped, tag = 'input window, operand 1, single buffered']
    #allocation7 [shape = 'u8[8192]{0}', space=vmem, size = 0x2000, scoped, tag = 'output window, operand 0, single buffered']
    %7 = vsyncpa [#allocation5], 0
    %8 = vsyncpa [#allocation3], 0
    %9 = vsyncpa [#allocation4], 0
    // Predicated region
    $region2: #{tpu_custom_call.1} parent=1 // pred_check
      _
    $region3: #{tpu_custom_call.1} parent=1 // pred_check_branch
      %11 = sbr.rel (0) target = $region5
    $region4: #{tpu_custom_call.1} parent=1 // pred_region
      %13 = vsyncadd [#allocation5], 0
      %s15 = sshll.u32 %s0, 4
      %s16 = int_to_ptr.hbm [resolvable:$true] %s15
      %18 = dma.hbm_to_smem %s16, 16, [#allocation2], [#allocation5]
    $region5: #{tpu_custom_call.1} parent=1 // pred_fallthru
      _
    // Predicated region
    $region6: #{tpu_custom_call.1} parent=1 // pred_check
      _
    $region7: #{tpu_custom_call.1} parent=1 // pred_check_branch
      %20 = sbr.rel (0) target = $region9
    $region8: #{tpu_custom_call.1} parent=1 // pred_region
      %22 = vsyncadd [#allocation3], 0
      %s23 = sshll.u32 %s1, 4
      %s24 = int_to_ptr.hbm [resolvable:$true] %s23
      %s25 = sshll.u32 [#allocation6], 4
      %s26 = int_to_ptr.vmem [resolvable:$true] %s25
      %31 = dma.hbm_to_vmem [thread:$0]  %s24, 512, %s26, [#allocation3], 256, 256, 16
    $region9: #{tpu_custom_call.1} parent=1 // pred_fallthru
      _
    // Predicated region
    $region10: #{tpu_custom_call.1} parent=1 // pred_check
      _
    $region11: #{tpu_custom_call.1} parent=1 // pred_check_branch
      %33 = sbr.rel (0) target = $region13
    $region12: #{tpu_custom_call.1} parent=1 // pred_region
      %35 = dma.done [#allocation5], 16
    $region13: #{tpu_custom_call.1} parent=1 // pred_fallthru
      _
    // Predicated region
    $region14: #{tpu_custom_call.1} parent=1 // pred_check
      _
    $region15: #{tpu_custom_call.1} parent=1 // pred_check_branch
      %37 = sbr.rel (0) target = $region17
    $region16: #{tpu_custom_call.1} parent=1 // pred_region
      %39 = dma.done [#allocation3], 512
    $region17: #{tpu_custom_call.1} parent=1 // pred_fallthru
      _
    %40 = sfence
    %s41 = sld [smem:[#allocation2]]
    %s42 = sld [smem:[#allocation2 + $0x1]]
    %s43 = sld [smem:[#allocation2 + $0x2]]
    %v44 = vld [vmem:[#allocation6] sm:$0xff]
    %v45 = vld [vmem:[#allocation6 + $0x8] sm:$0xff]
    %s46 = scalar_lea.vmem [#allocation6], 16
    %v47 = vld [vmem:[%s46] sm:$0xff]
    %v48 = vld [vmem:[%s46 + $0x8] sm:$0xff]
    %v49 = vstv %s41
    %v50 = vmul.f32 %v44, %v49
    %v51 = vmul.f32 %v45, %v49
    %v52 = vstv %s42
    %v53 = vmul.f32 %v47, %v52
    %v54 = vmul.f32 %v48, %v52
    %v55 = vadd.f32 %v50, %v53
    %v56 = vadd.f32 %v51, %v54
    %v57 = vstv %s43
    %v58 = vadd.f32 %v55, %v57
    %v59 = vadd.f32 %v56, %v57
    %60 = vst [vmem:[#allocation7] sm:$0xff] %v58
    %61 = vst [vmem:[#allocation7 + $0x8] sm:$0xff] %v59
    // Predicated region
    $region18: #{tpu_custom_call.1} parent=1 // pred_check
      _
    $region19: #{tpu_custom_call.1} parent=1 // pred_check_branch
      %63 = sbr.rel (0) target = $region21
    $region20: #{tpu_custom_call.1} parent=1 // pred_region
      %65 = vsyncadd [#allocation4], 0
      %s67 = sshll.u32 [#allocation7], 4
      %s68 = int_to_ptr.vmem [resolvable:$true] %s67
      %s69 = sshll.u32 %s2, 4
      %s70 = int_to_ptr.hbm [resolvable:$true] %s69
      %72 = dma.vmem_to_hbm [thread:$0]  %s68, 256, %s70, [#allocation4]
    $region21: #{tpu_custom_call.1} parent=1 // pred_fallthru
      _
    // Predicated region
    $region22: #{tpu_custom_call.1} parent=1 // pred_check
      _
    $region23: #{tpu_custom_call.1} parent=1 // pred_check_branch
      %74 = sbr.rel (0) target = $region25
    $region24: #{tpu_custom_call.1} parent=1 // pred_region
      %76 = dma.done [#allocation4], 256
    $region25: #{tpu_custom_call.1} parent=1 // pred_fallthru
      _
    %77 = vsyncpa [#allocation3], 1
    %78 = vsyncpa [#allocation4], 1
    %79 = vsyncpa [#allocation5], 1

</llo_original>
